<compile_context>
chip_gen: v6e
topology: v6e:2x2x1
jax: 0.10.0
libtpu: 0.0.40
codegen_flags: <defaults>
</compile_context>

<pallas_src>
import functools

import jax
import jax.numpy as jnp
from jax.experimental import pallas as pl
from jax.experimental.pallas import tpu as pltpu

POOL_K = 8
POOL_S = 4


def _semantic_linear_pool_kernel(x_ref, p_ref, w_ref, b_ref, o_ref, *, batch_block):
    # x_ref: (Bb, T,     C_in )  batch block of inputs
    # p_ref: (T_out, T)          constant averaging matrix (rows of 1/8)
    # w_ref: (C_in,  C_out)      pre-transposed nn.Linear weight
    # b_ref: (1,     C_out)      nn.Linear bias
    # o_ref: (Bb, T_out, C_out)
    p = p_ref[...]
    w = w_ref[...]
    bias = b_ref[...]
    for b in range(batch_block):  # short, static unroll; all ops are 2D MXU matmuls
        pooled = jnp.dot(p, x_ref[b], preferred_element_type=jnp.float32)
        y = jnp.dot(pooled, w, preferred_element_type=jnp.float32) + bias
        o_ref[b] = y.astype(o_ref.dtype)


def _pick_batch_block(B, max_block=8):
    """Largest divisor of B not exceeding max_block (bounds VMEM + unroll)."""
    if B <= max_block:
        return B
    for d in range(max_block, 0, -1):
        if B % d == 0:
            return d
    return 1


def semantic_linear_pool(x, weight, bias):
    """x: (B, T, C_in); weight: (C_out, C_in); bias: (C_out,)."""
    B, T, C_in = x.shape
    C_out = weight.shape[0]
    assert weight.shape == (C_out, C_in)
    T_out = (T - POOL_K) // POOL_S + 1
    assert T_out >= 1, "sequence too short for AvgPool1d(kernel=8, stride=4)"

    Bb = _pick_batch_block(B)
    grid = (B // Bb,)

    # MXU-native weight layout: (rows x C_in) @ (C_in x C_out).
    w_t = weight.T
    bias2d = bias.reshape(1, C_out)

    # Averaging matrix: P[j, t] = 1/8 for POOL_S*j <= t < POOL_S*j + POOL_K.
    t_idx = jnp.arange(T)[None, :]
    win_lo = jnp.arange(T_out)[:, None] * POOL_S
    P = jnp.where(
        (t_idx >= win_lo) & (t_idx < win_lo + POOL_K),
        jnp.asarray(1.0 / POOL_K, x.dtype),
        jnp.asarray(0.0, x.dtype),
    )  # (T_out, T)

    kernel = functools.partial(_semantic_linear_pool_kernel, batch_block=Bb)

    out = pl.pallas_call(
        kernel,
        out_shape=jax.ShapeDtypeStruct((B, T_out, C_out), x.dtype),
        grid_spec=pltpu.PrefetchScalarGridSpec(
            num_scalar_prefetch=0,
            grid=grid,
            in_specs=[
                pl.BlockSpec((Bb, T, C_in), lambda i: (i, 0, 0)),
                pl.BlockSpec((T_out, T), lambda i: (0, 0)),
                pl.BlockSpec((C_in, C_out), lambda i: (0, 0)),
                pl.BlockSpec((1, C_out), lambda i: (0, 0)),
            ],
            out_specs=pl.BlockSpec((Bb, T_out, C_out), lambda i: (i, 0, 0)),
        ),
        compiler_params=pltpu.CompilerParams(
            dimension_semantics=("parallel",),
        ),
    )(x, P, w_t, bias2d)

    return out


def _reference(x, weight, bias):
    # Pure-JAX reference matching the PyTorch forward (linear, then pool).
    y = jnp.einsum("btc,oc->bto", x, weight) + bias
    B, T, C_out = y.shape
    T_out = (T - POOL_K) // POOL_S + 1
    idx = jnp.arange(T_out)[:, None] * POOL_S + jnp.arange(POOL_K)[None, :]
    windows = y[:, idx, :]  # (B, T_out, 8, C_out)
    return windows.mean(axis=2)


if __name__ == "__main__":
    # Small shapes implied by forward: x is (batch, seq, in_channels).
    B, T = 2, 32
    in_channels, out_channels = 16, 32

    key = jax.random.PRNGKey(0)
    kx, kw, kb = jax.random.split(key, 3)

    x = jax.random.normal(kx, (B, T, in_channels), dtype=jnp.float32)

    # Deterministic nn.Linear-style init: U(-1/sqrt(in), 1/sqrt(in)).
    bound = 1.0 / (in_channels ** 0.5)
    weight = jax.random.uniform(
        kw, (out_channels, in_channels), jnp.float32, -bound, bound)
    bias = jax.random.uniform(kb, (out_channels,), jnp.float32, -bound, bound)

    out = semantic_linear_pool(x, weight, bias)
    out = jax.block_until_ready(out)

    ref = _reference(x, weight, bias)
    assert out.shape == ref.shape == (B, (T - POOL_K) // POOL_S + 1, out_channels)
    assert jnp.allclose(out, ref, atol=1e-5, rtol=1e-5)

    print("KERNEL_OK")
</pallas_src>

<mosaic_0001>
module attributes {stable_mosaic.version = 11 : i64} {
  func.func @_semantic_linear_pool_kernel(%arg0: i32, %arg1: memref<2x32x16xf32, #tpu.memory_space<vmem>>, %arg2: memref<7x32xf32, #tpu.memory_space<vmem>>, %arg3: memref<16x32xf32, #tpu.memory_space<vmem>>, %arg4: memref<1x32xf32, #tpu.memory_space<vmem>>, %arg5: memref<2x7x32xf32, #tpu.memory_space<vmem>>) attributes {dimension_semantics = [#tpu.dimension_semantics<parallel>], iteration_bounds = array<i64: 1>, scalar_prefetch = 0 : i64, scratch_operands = 0 : i64, tpu.core_type = #tpu.core_type<tc>, window_params = [{transform_indices = @transform_0, window_bounds = array<i64: 2, 32, 16>}, {pipeline_mode = #tpu.pipeline_mode<synchronous>, transform_indices = @transform_1, window_bounds = array<i64: 7, 32>}, {pipeline_mode = #tpu.pipeline_mode<synchronous>, transform_indices = @transform_2, window_bounds = array<i64: 16, 32>}, {pipeline_mode = #tpu.pipeline_mode<synchronous>, transform_indices = @transform_3, window_bounds = array<i64: 1, 32>}, {transform_indices = @transform_4, window_bounds = array<i64: 2, 7, 32>}]} {
    %c0 = arith.constant 0 : index
    %c0_0 = arith.constant 0 : index
    %0 = vector.load %arg2[%c0, %c0_0] : memref<7x32xf32, #tpu.memory_space<vmem>>, vector<7x32xf32>
    %c0_1 = arith.constant 0 : index
    %c0_2 = arith.constant 0 : index
    %1 = vector.load %arg3[%c0_1, %c0_2] : memref<16x32xf32, #tpu.memory_space<vmem>>, vector<16x32xf32>
    %c0_3 = arith.constant 0 : index
    %c0_4 = arith.constant 0 : index
    %2 = vector.load %arg4[%c0_3, %c0_4] : memref<1x32xf32, #tpu.memory_space<vmem>>, vector<1x32xf32>
    %c0_5 = arith.constant 0 : index
    %c0_6 = arith.constant 0 : index
    %c0_7 = arith.constant 0 : index
    %3 = vector.load %arg1[%c0_5, %c0_6, %c0_7] : memref<2x32x16xf32, #tpu.memory_space<vmem>>, vector<1x32x16xf32>
    %4 = vector.shape_cast %3 : vector<1x32x16xf32> to vector<32x16xf32>
    %cst = arith.constant dense<0.000000e+00> : vector<7x16xf32>
    %5 = tpu.matmul %0, %4, %cst {dimension_numbers = #tpu.dot_dimension_numbers<[1], [0], [0], [1], [0, 0, 1, 1], [], []>} : vector<7x32xf32>, vector<32x16xf32>, vector<7x16xf32> -> vector<7x16xf32>
    %cst_8 = arith.constant dense<0.000000e+00> : vector<7x32xf32>
    %6 = tpu.matmul %5, %1, %cst_8 {dimension_numbers = #tpu.dot_dimension_numbers<[1], [0], [0], [1], [0, 0, 1, 1], [], []>} : vector<7x16xf32>, vector<16x32xf32>, vector<7x32xf32> -> vector<7x32xf32>
    %7 = vector.broadcast %2 : vector<1x32xf32> to vector<7x32xf32>
    %8 = arith.addf %6, %7 : vector<7x32xf32>
    %c0_9 = arith.constant 0 : index
    %c0_10 = arith.constant 0 : index
    %c0_11 = arith.constant 0 : index
    %9 = vector.load %arg5[%c0_9, %c0_10, %c0_11] : memref<2x7x32xf32, #tpu.memory_space<vmem>>, vector<1x7x32xf32>
    %10 = vector.shape_cast %9 : vector<1x7x32xf32> to vector<7x32xf32>
    %11 = vector.shape_cast %8 : vector<7x32xf32> to vector<1x7x32xf32>
    tpu.vector_store %arg5[%c0_9, %c0_10, %c0_11], %11 {strides = array<i32>} : memref<2x7x32xf32, #tpu.memory_space<vmem>>, vector<1x7x32xf32>,
    %c1 = arith.constant 1 : index
    %c0_12 = arith.constant 0 : index
    %c0_13 = arith.constant 0 : index
    %12 = vector.load %arg1[%c1, %c0_12, %c0_13] : memref<2x32x16xf32, #tpu.memory_space<vmem>>, vector<1x32x16xf32>
    %13 = vector.shape_cast %12 : vector<1x32x16xf32> to vector<32x16xf32>
    %cst_14 = arith.constant dense<0.000000e+00> : vector<7x16xf32>
    %14 = tpu.matmul %0, %13, %cst_14 {dimension_numbers = #tpu.dot_dimension_numbers<[1], [0], [0], [1], [0, 0, 1, 1], [], []>} : vector<7x32xf32>, vector<32x16xf32>, vector<7x16xf32> -> vector<7x16xf32>
    %cst_15 = arith.constant dense<0.000000e+00> : vector<7x32xf32>
    %15 = tpu.matmul %14, %1, %cst_15 {dimension_numbers = #tpu.dot_dimension_numbers<[1], [0], [0], [1], [0, 0, 1, 1], [], []>} : vector<7x16xf32>, vector<16x32xf32>, vector<7x32xf32> -> vector<7x32xf32>
    %16 = vector.broadcast %2 : vector<1x32xf32> to vector<7x32xf32>
    %17 = arith.addf %15, %16 : vector<7x32xf32>
    %c1_16 = arith.constant 1 : index
    %c0_17 = arith.constant 0 : index
    %c0_18 = arith.constant 0 : index
    %18 = vector.load %arg5[%c1_16, %c0_17, %c0_18] : memref<2x7x32xf32, #tpu.memory_space<vmem>>, vector<1x7x32xf32>
    %19 = vector.shape_cast %18 : vector<1x7x32xf32> to vector<7x32xf32>
    %20 = vector.shape_cast %17 : vector<7x32xf32> to vector<1x7x32xf32>
    tpu.vector_store %arg5[%c1_16, %c0_17, %c0_18], %20 {strides = array<i32>} : memref<2x7x32xf32, #tpu.memory_space<vmem>>, vector<1x7x32xf32>,
    return
  }
  func.func @transform_0(%arg0: i32) -> (i32, i32, i32) {
    %c0_i32 = arith.constant 0 : i32
    %c0_i32_0 = arith.constant 0 : i32
    %c0_i32_1 = arith.constant 0 : i32
    return %arg0, %c0_i32, %c0_i32_0 : i32, i32, i32
  }
  func.func @transform_1(%arg0: i32) -> (i32, i32) {
    %c0_i32 = arith.constant 0 : i32
    %c0_i32_0 = arith.constant 0 : i32
    %c0_i32_1 = arith.constant 0 : i32
    return %c0_i32, %c0_i32_0 : i32, i32
  }
  func.func @transform_2(%arg0: i32) -> (i32, i32) {
    %c0_i32 = arith.constant 0 : i32
    %c0_i32_0 = arith.constant 0 : i32
    %c0_i32_1 = arith.constant 0 : i32
    return %c0_i32, %c0_i32_0 : i32, i32
  }
  func.func @transform_3(%arg0: i32) -> (i32, i32) {
    %c0_i32 = arith.constant 0 : i32
    %c0_i32_0 = arith.constant 0 : i32
    %c0_i32_1 = arith.constant 0 : i32
    return %c0_i32, %c0_i32_0 : i32, i32
  }
  func.func @transform_4(%arg0: i32) -> (i32, i32, i32) {
    %c0_i32 = arith.constant 0 : i32
    %c0_i32_0 = arith.constant 0 : i32
    %c0_i32_1 = arith.constant 0 : i32
    return %arg0, %c0_i32, %c0_i32_0 : i32, i32, i32
  }
}

</mosaic_0001>

<llo_original>
// kernel: tpu_custom_call.1
$region0: #{tpu_custom_call.1}
  #allocation0 [shape = 'u32[]', space=smem, size = 0x4, offset = 0x4, fixed_abs, tag = 'smem constant byte address 0x4 - core index']
  #allocation1 [shape = 'u32[144,128]{1,0:T(1,128)}', space=vmem, size = 0x12000, scoped, tag = 'internal scratch']
  %s0 = inlined_call_operand.vmem [shape: f32[2,32,16], index: 0, kind: input, shape index: {}]
  %s1 = inlined_call_operand.vmem [shape: f32[7,32], index: 1, kind: input, shape index: {}]
  %s2 = inlined_call_operand.vmem [shape: f32[16,32], index: 2, kind: input, shape index: {}]
  %s3 = inlined_call_operand.vmem [shape: f32[1,32], index: 3, kind: input, shape index: {}]
  %s4 = inlined_call_operand.vmem [shape: f32[2,7,32], index: 4, kind: output, shape index: {}]
  %s5 = sld [smem:[#allocation0]]
  $region26: #{tpu_custom_call.1} parent=0
    _
  %s7 = ssub.s32 1, %s5
  %s8 = scalar_select 0, %s7, %s5
  // Predicated region
  $region2: #{tpu_custom_call.1} parent=0 // pred_check
    _
  $region3: #{tpu_custom_call.1} parent=0 // pred_check_branch
    %10 = sbr.rel (0) target = $region5
  $region4: #{tpu_custom_call.1} parent=0 // pred_region
    _
  $region5: #{tpu_custom_call.1} parent=0 // pred_fallthru
    _
  // Predicated region
  $region6: #{tpu_custom_call.1} parent=0 // pred_check
    _
  $region7: #{tpu_custom_call.1} parent=0 // pred_check_branch
    %12 = sbr.rel (0) target = $region9
  $region8: #{tpu_custom_call.1} parent=0 // pred_region
    _
  $region9: #{tpu_custom_call.1} parent=0 // pred_fallthru
    _
  // Predicated region
  $region10: #{tpu_custom_call.1} parent=0 // pred_check
    _
  $region11: #{tpu_custom_call.1} parent=0 // pred_check_branch
    %14 = sbr.rel (0) target = $region13
  $region12: #{tpu_custom_call.1} parent=0 // pred_region
    _
  $region13: #{tpu_custom_call.1} parent=0 // pred_fallthru
    _
  // Predicated region
  $region14: #{tpu_custom_call.1} parent=0 // pred_check
    _
  $region15: #{tpu_custom_call.1} parent=0 // pred_check_branch
    %16 = sbr.rel (0) target = $region17
  $region16: #{tpu_custom_call.1} parent=0 // pred_region
    _
  $region17: #{tpu_custom_call.1} parent=0 // pred_fallthru
    _
  %v17 = vld [vmem:[%s1] sm:$0x7f]
  %v18 = vld [vmem:[%s2] sm:$0xff]
  %v19 = vld [vmem:[%s2 + $0x8] sm:$0xff]
  %v20 = vld [vmem:[%s3] sm:$0x1]
  %v21 = vld [vmem:[%s0] sm:$0xff]
  %v22 = vld [vmem:[%s0 + $0x8] sm:$0xff]
  %v23 = vld [vmem:[%s0 + $0x10] sm:$0xff]
  %v24 = vld [vmem:[%s0 + $0x18] sm:$0xff]
  %vm25 = vcmask 261120
  %v27 = vsel %vm25, %v17, 0
  %29 = vmatprep.subr.mxu0 0.0
  %30 = vmatpush1.msra.mxu0 0.0
  %31 = vmatprep.subr.mxu0 0.0
  %32 = vmatpush1.msra.mxu0 0.0
  %33 = vmatprep.subr.mxu0 0.0
  %34 = vmatpush1.msra.mxu0 0.0
  %35 = vmatprep.subr.mxu0 0.0
  %36 = vmatpush1.msra.mxu0 0.0
  %37 = vmatprep.subr.mxu0 0.0
  %38 = vmatpush1.msra.mxu0 0.0
  %39 = vmatprep.subr.mxu0 0.0
  %40 = vmatpush1.msra.mxu0 0.0
  %41 = vmatprep.subr.mxu0 0.0
  %42 = vmatpush1.msra.mxu0 0.0
  %43 = vmatprep.subr.mxu0 0.0
  %44 = vmatpush1.msra.mxu0 0.0
  %45 = vmatprep.subr.mxu0 0.0
  %46 = vmatpush1.msra.mxu0 0.0
  %47 = vmatprep.subr.mxu0 0.0
  %48 = vmatpush1.msra.mxu0 0.0
  %49 = vmatprep.subr.mxu0 0.0
  %50 = vmatpush1.msra.mxu0 0.0
  %51 = vmatprep.subr.mxu0 0.0
  %52 = vmatpush1.msra.mxu0 0.0
  %53 = vmatprep.subr.mxu0 0.0
  %54 = vmatpush1.msra.mxu0 %v24
  %55 = vmatprep.subr.mxu0 0.0
  %56 = vmatpush1.msra.mxu0 %v23
  %57 = vmatprep.subr.mxu0 0.0
  %58 = vmatpush1.msra.mxu0 %v22
  %59 = vmatprep.subr.mxu0 0.0
  %60 = vmatpush1.msra.mxu0 %v21
  %61 = vmatprep.subr.mxu0 0.0
  %62 = vmatpush2.msra.mxu0 0.0
  %63 = vmatprep.subr.mxu0 0.0
  %64 = vmatpush2.msra.mxu0 0.0
  %65 = vmatprep.subr.mxu0 0.0
  %66 = vmatpush2.msra.mxu0 0.0
  %67 = vmatprep.subr.mxu0 0.0
  %68 = vmatpush2.msra.mxu0 0.0
  %69 = vmatprep.subr.mxu0 0.0
  %70 = vmatpush2.msra.mxu0 0.0
  %71 = vmatprep.subr.mxu0 0.0
  %72 = vmatpush2.msra.mxu0 0.0
  %73 = vmatprep.subr.mxu0 0.0
  %74 = vmatpush2.msra.mxu0 0.0
  %75 = vmatprep.subr.mxu0 0.0
  %76 = vmatpush2.msra.mxu0 0.0
  %77 = vmatprep.subr.mxu0 0.0
  %78 = vmatpush2.msra.mxu0 0.0
  %79 = vmatprep.subr.mxu0 0.0
  %80 = vmatpush2.msra.mxu0 0.0
  %81 = vmatprep.subr.mxu0 0.0
  %82 = vmatpush2.msra.mxu0 0.0
  %83 = vmatprep.subr.mxu0 0.0
  %84 = vmatpush2.msra.mxu0 0.0
  %85 = vmatprep.subr.mxu0 0.0
  %86 = vmatpush2.msra.mxu0 0.0
  %87 = vmatprep.subr.mxu0 0.0
  %88 = vmatpush2.msra.mxu0 0.0
  %89 = vmatprep.subr.mxu0 0.0
  %90 = vmatpush2.msra.mxu0 0.0
  %91 = vmatprep.subr.mxu0 0.0
  %92 = vmatpush2.msra.mxu0 0.0
  %93 = vmatprep.mubr.f32.mxu0 0.0
  %94 = vmatmul.mubr.f32.gmra.mxu0 %v27
  %v95 = vpop.f32.mrf.mxu0
  %v96 = vadd.f32 0.0, %v95
  %v97 = vpop.f32.mrf.mxu0
  %98 = vdwg.mxu0
  %v100 = vlaneseq
  %v101 = vshrl.u32 %v100, 7
  %v102 = vsub.s32 0, %v101
  %v103 = vrot.slane %v20, %v102
  %vm105 = vcmask 130048
  %v107 = vsel %vm105, %v96, 0
  %109 = vmatprep.subr.mxu0 0.0
  %110 = vmatpush1.msra.mxu0 0.0
  %111 = vmatprep.subr.mxu0 0.0
  %112 = vmatpush1.msra.mxu0 0.0
  %113 = vmatprep.subr.mxu0 0.0
  %114 = vmatpush1.msra.mxu0 0.0
  %115 = vmatprep.subr.mxu0 0.0
  %116 = vmatpush1.msra.mxu0 0.0
  %117 = vmatprep.subr.mxu0 0.0
  %118 = vmatpush1.msra.mxu0 0.0
  %119 = vmatprep.subr.mxu0 0.0
  %120 = vmatpush1.msra.mxu0 0.0
  %121 = vmatprep.subr.mxu0 0.0
  %122 = vmatpush1.msra.mxu0 0.0
  %123 = vmatprep.subr.mxu0 0.0
  %124 = vmatpush1.msra.mxu0 0.0
  %125 = vmatprep.subr.mxu0 0.0
  %126 = vmatpush1.msra.mxu0 0.0
  %127 = vmatprep.subr.mxu0 0.0
  %128 = vmatpush1.msra.mxu0 0.0
  %129 = vmatprep.subr.mxu0 0.0
  %130 = vmatpush1.msra.mxu0 0.0
  %131 = vmatprep.subr.mxu0 0.0
  %132 = vmatpush1.msra.mxu0 0.0
  %133 = vmatprep.subr.mxu0 0.0
  %134 = vmatpush1.msra.mxu0 0.0
  %135 = vmatprep.subr.mxu0 0.0
  %136 = vmatpush1.msra.mxu0 0.0
  %137 = vmatprep.subr.mxu0 0.0
  %138 = vmatpush1.msra.mxu0 %v19
  %139 = vmatprep.subr.mxu0 0.0
  %140 = vmatpush1.msra.mxu0 %v18
  %141 = vmatprep.subr.mxu0 0.0
  %142 = vmatpush2.msra.mxu0 0.0
  %143 = vmatprep.subr.mxu0 0.0
  %144 = vmatpush2.msra.mxu0 0.0
  %145 = vmatprep.subr.mxu0 0.0
  %146 = vmatpush2.msra.mxu0 0.0
  %147 = vmatprep.subr.mxu0 0.0
  %148 = vmatpush2.msra.mxu0 0.0
  %149 = vmatprep.subr.mxu0 0.0
  %150 = vmatpush2.msra.mxu0 0.0
  %151 = vmatprep.subr.mxu0 0.0
  %152 = vmatpush2.msra.mxu0 0.0
  %153 = vmatprep.subr.mxu0 0.0
  %154 = vmatpush2.msra.mxu0 0.0
  %155 = vmatprep.subr.mxu0 0.0
  %156 = vmatpush2.msra.mxu0 0.0
  %157 = vmatprep.subr.mxu0 0.0
  %158 = vmatpush2.msra.mxu0 0.0
  %159 = vmatprep.subr.mxu0 0.0
  %160 = vmatpush2.msra.mxu0 0.0
  %161 = vmatprep.subr.mxu0 0.0
  %162 = vmatpush2.msra.mxu0 0.0
  %163 = vmatprep.subr.mxu0 0.0
  %164 = vmatpush2.msra.mxu0 0.0
  %165 = vmatprep.subr.mxu0 0.0
  %166 = vmatpush2.msra.mxu0 0.0
  %167 = vmatprep.subr.mxu0 0.0
  %168 = vmatpush2.msra.mxu0 0.0
  %169 = vmatprep.subr.mxu0 0.0
  %170 = vmatpush2.msra.mxu0 0.0
  %171 = vmatprep.subr.mxu0 0.0
  %172 = vmatpush2.msra.mxu0 0.0
  %173 = vmatprep.mubr.f32.mxu0 0.0
  %174 = vmatmul.mubr.f32.gmra.mxu0 %v107
  %v175 = vpop.f32.mrf.mxu0
  %v176 = vadd.f32 %v103, %v175
  %v177 = vpop.f32.mrf.mxu0
  %178 = vdwg.mxu0
  %vm179 = vcmask 260096
  %180 = vst.msk [vmem:[%s4] sm:$0x7f] %vm179, %v176
  %s181 = scalar_lea.vmem %s0, 32
  %v182 = vld [vmem:[%s181] sm:$0xff]
  %v183 = vld [vmem:[%s181 + $0x8] sm:$0xff]
  %v184 = vld [vmem:[%s181 + $0x10] sm:$0xff]
  %v185 = vld [vmem:[%s181 + $0x18] sm:$0xff]
  %186 = vmatprep.subr.mxu0 0.0
  %187 = vmatpush1.msra.mxu0 0.0
  %188 = vmatprep.subr.mxu0 0.0
  %189 = vmatpush1.msra.mxu0 0.0
  %190 = vmatprep.subr.mxu0 0.0
  %191 = vmatpush1.msra.mxu0 0.0
  %192 = vmatprep.subr.mxu0 0.0
  %193 = vmatpush1.msra.mxu0 0.0
  %194 = vmatprep.subr.mxu0 0.0
  %195 = vmatpush1.msra.mxu0 0.0
  %196 = vmatprep.subr.mxu0 0.0
  %197 = vmatpush1.msra.mxu0 0.0
  %198 = vmatprep.subr.mxu0 0.0
  %199 = vmatpush1.msra.mxu0 0.0
  %200 = vmatprep.subr.mxu0 0.0
  %201 = vmatpush1.msra.mxu0 0.0
  %202 = vmatprep.subr.mxu0 0.0
  %203 = vmatpush1.msra.mxu0 0.0
  %204 = vmatprep.subr.mxu0 0.0
  %205 = vmatpush1.msra.mxu0 0.0
  %206 = vmatprep.subr.mxu0 0.0
  %207 = vmatpush1.msra.mxu0 0.0
  %208 = vmatprep.subr.mxu0 0.0
  %209 = vmatpush1.msra.mxu0 0.0
  %210 = vmatprep.subr.mxu0 0.0
  %211 = vmatpush1.msra.mxu0 %v185
  %212 = vmatprep.subr.mxu0 0.0
  %213 = vmatpush1.msra.mxu0 %v184
  %214 = vmatprep.subr.mxu0 0.0
  %215 = vmatpush1.msra.mxu0 %v183
  %216 = vmatprep.subr.mxu0 0.0
  %217 = vmatpush1.msra.mxu0 %v182
  %218 = vmatprep.subr.mxu0 0.0
  %219 = vmatpush2.msra.mxu0 0.0
  %220 = vmatprep.subr.mxu0 0.0
  %221 = vmatpush2.msra.mxu0 0.0
  %222 = vmatprep.subr.mxu0 0.0
  %223 = vmatpush2.msra.mxu0 0.0
  %224 = vmatprep.subr.mxu0 0.0
  %225 = vmatpush2.msra.mxu0 0.0
  %226 = vmatprep.subr.mxu0 0.0
  %227 = vmatpush2.msra.mxu0 0.0
  %228 = vmatprep.subr.mxu0 0.0
  %229 = vmatpush2.msra.mxu0 0.0
  %230 = vmatprep.subr.mxu0 0.0
  %231 = vmatpush2.msra.mxu0 0.0
  %232 = vmatprep.subr.mxu0 0.0
  %233 = vmatpush2.msra.mxu0 0.0
  %234 = vmatprep.subr.mxu0 0.0
  %235 = vmatpush2.msra.mxu0 0.0
  %236 = vmatprep.subr.mxu0 0.0
  %237 = vmatpush2.msra.mxu0 0.0
  %238 = vmatprep.subr.mxu0 0.0
  %239 = vmatpush2.msra.mxu0 0.0
  %240 = vmatprep.subr.mxu0 0.0
  %241 = vmatpush2.msra.mxu0 0.0
  %242 = vmatprep.subr.mxu0 0.0
  %243 = vmatpush2.msra.mxu0 0.0
  %244 = vmatprep.subr.mxu0 0.0
  %245 = vmatpush2.msra.mxu0 0.0
  %246 = vmatprep.subr.mxu0 0.0
  %247 = vmatpush2.msra.mxu0 0.0
  %248 = vmatprep.subr.mxu0 0.0
  %249 = vmatpush2.msra.mxu0 0.0
  %250 = vmatprep.mubr.f32.mxu0 0.0
  %251 = vmatmul.mubr.f32.gmra.mxu0 %v27
  %v252 = vpop.f32.mrf.mxu0
  %v253 = vadd.f32 0.0, %v252
  %v254 = vpop.f32.mrf.mxu0
  %255 = vdwg.mxu0
  %v257 = vsel %vm105, %v253, 0
  %259 = vmatprep.subr.mxu0 0.0
  %260 = vmatpush1.msra.mxu0 0.0
  %261 = vmatprep.subr.mxu0 0.0
  %262 = vmatpush1.msra.mxu0 0.0
  %263 = vmatprep.subr.mxu0 0.0
  %264 = vmatpush1.msra.mxu0 0.0
  %265 = vmatprep.subr.mxu0 0.0
  %266 = vmatpush1.msra.mxu0 0.0
  %267 = vmatprep.subr.mxu0 0.0
  %268 = vmatpush1.msra.mxu0 0.0
  %269 = vmatprep.subr.mxu0 0.0
  %270 = vmatpush1.msra.mxu0 0.0
  %271 = vmatprep.subr.mxu0 0.0
  %272 = vmatpush1.msra.mxu0 0.0
  %273 = vmatprep.subr.mxu0 0.0
  %274 = vmatpush1.msra.mxu0 0.0
  %275 = vmatprep.subr.mxu0 0.0
  %276 = vmatpush1.msra.mxu0 0.0
  %277 = vmatprep.subr.mxu0 0.0
  %278 = vmatpush1.msra.mxu0 0.0
  %279 = vmatprep.subr.mxu0 0.0
  %280 = vmatpush1.msra.mxu0 0.0
  %281 = vmatprep.subr.mxu0 0.0
  %282 = vmatpush1.msra.mxu0 0.0
  %283 = vmatprep.subr.mxu0 0.0
  %284 = vmatpush1.msra.mxu0 0.0
  %285 = vmatprep.subr.mxu0 0.0
  %286 = vmatpush1.msra.mxu0 0.0
  %287 = vmatprep.subr.mxu0 0.0
  %288 = vmatpush1.msra.mxu0 %v19
  %289 = vmatprep.subr.mxu0 0.0
  %290 = vmatpush1.msra.mxu0 %v18
  %291 = vmatprep.subr.mxu0 0.0
  %292 = vmatpush2.msra.mxu0 0.0
  %293 = vmatprep.subr.mxu0 0.0
  %294 = vmatpush2.msra.mxu0 0.0
  %295 = vmatprep.subr.mxu0 0.0
  %296 = vmatpush2.msra.mxu0 0.0
  %297 = vmatprep.subr.mxu0 0.0
  %298 = vmatpush2.msra.mxu0 0.0
  %299 = vmatprep.subr.mxu0 0.0
  %300 = vmatpush2.msra.mxu0 0.0
  %301 = vmatprep.subr.mxu0 0.0
  %302 = vmatpush2.msra.mxu0 0.0
  %303 = vmatprep.subr.mxu0 0.0
  %304 = vmatpush2.msra.mxu0 0.0
  %305 = vmatprep.subr.mxu0 0.0
  %306 = vmatpush2.msra.mxu0 0.0
  %307 = vmatprep.subr.mxu0 0.0
  %308 = vmatpush2.msra.mxu0 0.0
  %309 = vmatprep.subr.mxu0 0.0
  %310 = vmatpush2.msra.mxu0 0.0
  %311 = vmatprep.subr.mxu0 0.0
  %312 = vmatpush2.msra.mxu0 0.0
  %313 = vmatprep.subr.mxu0 0.0
  %314 = vmatpush2.msra.mxu0 0.0
  %315 = vmatprep.subr.mxu0 0.0
  %316 = vmatpush2.msra.mxu0 0.0
  %317 = vmatprep.subr.mxu0 0.0
  %318 = vmatpush2.msra.mxu0 0.0
  %319 = vmatprep.subr.mxu0 0.0
  %320 = vmatpush2.msra.mxu0 0.0
  %321 = vmatprep.subr.mxu0 0.0
  %322 = vmatpush2.msra.mxu0 0.0
  %323 = vmatprep.mubr.f32.mxu0 0.0
  %324 = vmatmul.mubr.f32.gmra.mxu0 %v257
  %v325 = vpop.f32.mrf.mxu0
  %v326 = vadd.f32 %v103, %v325
  %v327 = vpop.f32.mrf.mxu0
  %328 = vdwg.mxu0
  %s329 = scalar_lea.vmem %s4, 8
  %330 = vst.msk [vmem:[%s329] sm:$0x7f] %vm179, %v326
  // Predicated region
  $region18: #{tpu_custom_call.1} parent=0 // pred_check
    _
  $region19: #{tpu_custom_call.1} parent=0 // pred_check_branch
    %332 = sbr.rel (0) target = $region21
  $region20: #{tpu_custom_call.1} parent=0 // pred_region
    _
  $region21: #{tpu_custom_call.1} parent=0 // pred_fallthru
    _
  // Predicated region
  $region22: #{tpu_custom_call.1} parent=0 // pred_check
    _
  $region23: #{tpu_custom_call.1} parent=0 // pred_check_branch
    %334 = sbr.rel (0) target = $region25
  $region24: #{tpu_custom_call.1} parent=0 // pred_region
    _
  $region25: #{tpu_custom_call.1} parent=0 // pred_fallthru
    _

</llo_original>
